<compile_context>
chip_gen: v5e
topology: v5e:2x2
jax: 0.10.0
libtpu: 0.0.40
codegen_flags: <defaults>
</compile_context>

<pallas_src>
import functools

import jax
import jax.numpy as jnp
from jax.experimental import pallas as pl
from jax.experimental.pallas import tpu as pltpu


# ---------------------------------------------------------------------------
# Kernel bodies
# ---------------------------------------------------------------------------

def _max_abs_tanh_kernel(x_ref, out_ref):
    """Global max|tanh(x)| with a VMEM-resident (1,1) accumulator."""
    @pl.when(pl.program_id(0) == 0)
    def _init():
        # max|tanh| >= 0, so 0 is a valid init (also neutral w.r.t. zero padding).
        out_ref[...] = jnp.zeros_like(out_ref)

    blk_max = jnp.max(jnp.abs(jnp.tanh(x_ref[...].astype(jnp.float32))))
    out_ref[...] = jnp.maximum(out_ref[...], blk_max)


def _sum_abs_kernel(x_ref, out_ref):
    """Global sum|x| with a VMEM-resident (1,1) accumulator."""
    @pl.when(pl.program_id(0) == 0)
    def _init():
        out_ref[...] = jnp.zeros_like(out_ref)

    out_ref[...] = out_ref[...] + jnp.sum(jnp.abs(x_ref[...].astype(jnp.float32)))


def _quant_block_kernel(scale_ref, x_ref, o_ref, *, q_levels, inv_q_levels):
    """Elementwise DoReFa quantization; scale_ref holds 1/(2*max|tanh|) in SMEM."""
    inv_2max = scale_ref[0]                          # one scalar read per block
    w = jnp.tanh(x_ref[...].astype(jnp.float32))
    r_i = w * inv_2max + 0.5
    r_q = jnp.round(r_i * q_levels) * inv_q_levels   # constants baked at trace time
    o_ref[...] = (2.0 * r_q - 1.0).astype(o_ref.dtype)


def _sign_scale_kernel(mu_ref, x_ref, o_ref):
    """Elementwise sign(x) * mu; mu is an SMEM scalar."""
    mu = mu_ref[0]
    x = x_ref[...].astype(jnp.float32)
    s = jnp.where(x > 0.0, 1.0, jnp.where(x < 0.0, -1.0, 0.0))
    o_ref[...] = (s * mu).astype(o_ref.dtype)


def _fused_quant_kernel(x_ref, o_ref, *, q_levels, inv_q_levels):
    """Single-pass DoReFa quantization with the whole slab resident in VMEM."""
    w = jnp.tanh(x_ref[...].astype(jnp.float32))
    max_w = jnp.max(jnp.abs(w))
    r_i = w * (0.5 / max_w) + 0.5
    r_q = jnp.round(r_i * q_levels) * inv_q_levels
    o_ref[...] = (2.0 * r_q - 1.0).astype(o_ref.dtype)


def _fused_sign_kernel(x_ref, o_ref, *, inv_count):
    """Single-pass 1-bit path: mu = mean(|x|), out = sign(x) * mu."""
    x = x_ref[...].astype(jnp.float32)
    mu = jnp.sum(jnp.abs(x)) * inv_count
    s = jnp.where(x > 0.0, 1.0, jnp.where(x < 0.0, -1.0, 0.0))
    o_ref[...] = (s * mu).astype(o_ref.dtype)


# ---------------------------------------------------------------------------
# pallas_call wrappers
# ---------------------------------------------------------------------------

def _pad_and_reshape_2d(flat, lane, block_rows):
    """Pure contiguous reshape to a lane-dense (rows, lane) slab."""
    n = flat.shape[0]
    block_elems = block_rows * lane
    if n % block_elems == 0:
        rows = n // lane
        br = block_rows
    elif n <= block_elems:
        padded = -(-n // lane) * lane
        rows = padded // lane
        br = rows                       # single block == full array dims (always legal)
    else:
        padded = -(-n // block_elems) * block_elems
        rows = padded // lane
        br = block_rows
    pad = rows * lane - n
    if pad:
        # Zero padding is neutral for both reductions (max|tanh| >= 0, sum|x|)
        # and the padded outputs are sliced off before un-flattening.
        # TODO(synk): replace the materialized pad with a masked tail tile for
        # very large ragged tensors to avoid one extra HBM copy.
        flat = jnp.pad(flat, (0, pad))
    return flat.reshape(rows, lane), br


def _streaming_reduce(kernel, x2d, block_rows, *, transcendentals):
    rows, lane = x2d.shape
    n = rows * lane
    cost = pl.CostEstimate(
        flops=2 * n,
        transcendentals=transcendentals,
        bytes_accessed=n * x2d.dtype.itemsize + 4,
    )
    out = pl.pallas_call(
        kernel,
        out_shape=jax.ShapeDtypeStruct((1, 1), jnp.float32),
        grid=(rows // block_rows,),
        in_specs=[pl.BlockSpec((block_rows, lane), lambda i: (i, 0))],
        out_specs=pl.BlockSpec((1, 1), lambda i: (0, 0)),   # resident accumulator
        compiler_params=pltpu.CompilerParams(dimension_semantics=("arbitrary",)),
        cost_estimate=cost,
    )(x2d)
    return out[0, 0]


def _streaming_elementwise(kernel, scalar, x2d, out_dtype, block_rows, *, transcendentals):
    rows, lane = x2d.shape
    n = rows * lane
    cost = pl.CostEstimate(
        flops=6 * n,
        transcendentals=transcendentals,
        bytes_accessed=n * (x2d.dtype.itemsize + jnp.dtype(out_dtype).itemsize),
    )
    return pl.pallas_call(
        kernel,
        out_shape=jax.ShapeDtypeStruct((rows, lane), out_dtype),
        grid=(rows // block_rows,),
        in_specs=[
            pl.BlockSpec(memory_space=pltpu.MemorySpace.SMEM),      # scalar hand-off
            pl.BlockSpec((block_rows, lane), lambda i: (i, 0)),
        ],
        out_specs=pl.BlockSpec((block_rows, lane), lambda i: (i, 0)),
        compiler_params=pltpu.CompilerParams(dimension_semantics=("parallel",)),
        cost_estimate=cost,
    )(scalar, x2d)


def _call_fused(kernel, x2d, out_dtype, *, transcendentals):
    rows, lane = x2d.shape
    n = rows * lane
    cost = pl.CostEstimate(
        flops=8 * n,
        transcendentals=transcendentals,
        bytes_accessed=n * (x2d.dtype.itemsize + jnp.dtype(out_dtype).itemsize),
    )
    return pl.pallas_call(
        kernel,
        out_shape=jax.ShapeDtypeStruct((rows, lane), out_dtype),
        cost_estimate=cost,
    )(x2d)


# ---------------------------------------------------------------------------
# Public entry point (forward pass of QuantizationWeight)
# ---------------------------------------------------------------------------

def dorefa_quantize_weight(x, w_bits, *, block_rows=512, lane=1024,
                           fused_vmem_budget_bytes=8 * 1024 * 1024,
                           force_two_pass=False):
    """Pallas TPU implementation of QuantizationWeight.forward(x)."""
    if not (1 <= w_bits <= 32):
        raise ValueError(f"w_bits must be in [1, 32], got {w_bits}")
    if w_bits == 32:
        return x

    orig_shape = x.shape
    out_dtype = x.dtype
    n = x.size
    flat = x.reshape(-1)                      # contiguous reshape, no transpose
    x2d, br = _pad_and_reshape_2d(flat, lane, block_rows)

    # Keep the whole slab resident in VMEM (1 read + 1 write, tanh once) when it
    # comfortably fits scoped VMEM; 8 MiB is safe on v5e/v6e (128 MiB) and v7x (64 MiB/TC).
    use_fused = (not force_two_pass) and (x2d.size * 4 <= fused_vmem_budget_bytes)

    if w_bits == 1:
        if use_fused:
            kernel = functools.partial(_fused_sign_kernel, inv_count=1.0 / float(n))
            y2d = _call_fused(kernel, x2d, out_dtype, transcendentals=0)
        else:
            total = _streaming_reduce(_sum_abs_kernel, x2d, br, transcendentals=0)
            mu = (total / float(n)).astype(jnp.float32).reshape(1)
            y2d = _streaming_elementwise(_sign_scale_kernel, mu, x2d, out_dtype, br,
                                         transcendentals=0)
    else:
        q = float(2 ** w_bits - 1)
        if use_fused:
            kernel = functools.partial(_fused_quant_kernel,
                                       q_levels=q, inv_q_levels=1.0 / q)
            y2d = _call_fused(kernel, x2d, out_dtype, transcendentals=x2d.size)
        else:
            max_w = _streaming_reduce(_max_abs_tanh_kernel, x2d, br,
                                      transcendentals=x2d.size)
            inv_2max = (0.5 / max_w).astype(jnp.float32).reshape(1)   # computed once
            kernel = functools.partial(_quant_block_kernel,
                                       q_levels=q, inv_q_levels=1.0 / q)
            y2d = _streaming_elementwise(kernel, inv_2max, x2d, out_dtype, br,
                                         transcendentals=x2d.size)

    return y2d.reshape(-1)[:n].reshape(orig_shape)


# ---------------------------------------------------------------------------
# Pure-JAX reference (mirror of the PyTorch module) + demo
# ---------------------------------------------------------------------------

def _reference(x, w_bits):
    if w_bits == 32:
        return x
    if w_bits == 1:
        mu = jnp.mean(jnp.abs(x))
        return jnp.sign(x / mu) * mu
    q = float(2 ** w_bits - 1)
    w = jnp.tanh(x.astype(jnp.float32))
    max_w = jnp.max(jnp.abs(w))
    r_i = w / (2.0 * max_w) + 0.5
    r_q = jnp.round(q * r_i) / q
    return (2.0 * r_q - 1.0).astype(x.dtype)


if __name__ == "__main__":
    key = jax.random.PRNGKey(0)
    # Small conv-like weight tensor (O, I, H, W).
    x = jax.random.normal(key, (2, 4, 16, 16), dtype=jnp.float32)

    # k-bit path (w_bits = 4): fused single-pass kernel.
    y4 = dorefa_quantize_weight(x, 4)
    y4 = jax.block_until_ready(y4)

    # Same math through the two-pass streaming kernels (small blocks so the
    # reduction grid actually has multiple steps on this tiny tensor).
    y4_stream = dorefa_quantize_weight(x, 4, force_two_pass=True,
                                       block_rows=8, lane=128)
    y4_stream = jax.block_until_ready(y4_stream)

    # 1-bit and 32-bit branches.
    y1 = dorefa_quantize_weight(x, 1)
    y32 = dorefa_quantize_weight(x, 32)
    jax.block_until_ready((y1, y32))

    # Correctness checks vs. the pure-JAX reference.  tanh/max may differ by a
    # few ULPs between the TPU EUP and XLA, which can flip an element sitting
    # exactly on a rounding boundary by one level -> allow one level of slack.
    ref4 = _reference(x, 4)
    ref1 = _reference(x, 1)
    q4 = float(2 ** 4 - 1)
    assert y4.shape == x.shape and y4.dtype == x.dtype
    assert float(jnp.max(jnp.abs(y4 - ref4))) <= 2.0 / q4 + 1e-4
    assert float(jnp.max(jnp.abs(y4_stream - ref4))) <= 2.0 / q4 + 1e-4
    assert float(jnp.max(jnp.abs(y1 - ref1))) <= 1e-4
    assert bool(jnp.all(y32 == x))

    print("KERNEL_OK")
</pallas_src>

<mosaic_0001>
module attributes {stable_mosaic.version = 11 : i64} {
  func.func @_fused_quant_kernel(%arg0: memref<2x1024xf32, #tpu.memory_space<vmem>>, %arg1: memref<2x1024xf32, #tpu.memory_space<vmem>>) attributes {dimension_semantics = [], scalar_prefetch = 0 : i64, scratch_operands = 0 : i64, tpu.core_type = #tpu.core_type<tc>} {
    %c0 = arith.constant 0 : index
    %c0_0 = arith.constant 0 : index
    %0 = vector.load %arg0[%c0, %c0_0] : memref<2x1024xf32, #tpu.memory_space<vmem>>, vector<2x1024xf32>
    %1 = math.tanh %0 : vector<2x1024xf32>
    %2 = math.absf %1 : vector<2x1024xf32>
    %3 = vector.shape_cast %2 : vector<2x1024xf32> to vector<1x2x1024xf32>
    %cst = arith.constant dense<0xFF800000> : vector<1xf32>
    %4 = vector.multi_reduction <maximumf>, %3, %cst [1, 2] : vector<1x2x1024xf32> to vector<1xf32>
    %5 = vector.shape_cast %4 : vector<1xf32> to vector<1x1x1xf32>
    %6 = vector.extract %5[0, 0, 0] : f32 from vector<1x1x1xf32>
    %cst_1 = arith.constant 5.000000e-01 : f32
    %7 = arith.divf %cst_1, %6 : f32
    %8 = vector.broadcast %7 : f32 to vector<2x1024xf32>
    %9 = arith.mulf %1, %8 : vector<2x1024xf32>
    %cst_2 = arith.constant 5.000000e-01 : f32
    %10 = vector.broadcast %cst_2 : f32 to vector<2x1024xf32>
    %11 = arith.addf %9, %10 : vector<2x1024xf32>
    %cst_3 = arith.constant 1.500000e+01 : f32
    %12 = vector.broadcast %cst_3 : f32 to vector<2x1024xf32>
    %13 = arith.mulf %11, %12 : vector<2x1024xf32>
    %14 = math.roundeven %13 : vector<2x1024xf32>
    %cst_4 = arith.constant 0.0666666701 : f32
    %15 = vector.broadcast %cst_4 : f32 to vector<2x1024xf32>
    %16 = arith.mulf %14, %15 : vector<2x1024xf32>
    %cst_5 = arith.constant 2.000000e+00 : f32
    %17 = vector.broadcast %cst_5 : f32 to vector<2x1024xf32>
    %18 = arith.mulf %17, %16 : vector<2x1024xf32>
    %cst_6 = arith.constant 1.000000e+00 : f32
    %19 = vector.broadcast %cst_6 : f32 to vector<2x1024xf32>
    %20 = arith.subf %18, %19 : vector<2x1024xf32>
    %c0_7 = arith.constant 0 : index
    %c0_8 = arith.constant 0 : index
    %21 = vector.load %arg1[%c0_7, %c0_8] : memref<2x1024xf32, #tpu.memory_space<vmem>>, vector<2x1024xf32>
    tpu.vector_store %arg1[%c0_7, %c0_8], %20 {strides = array<i32>} : memref<2x1024xf32, #tpu.memory_space<vmem>>, vector<2x1024xf32>,
    return
  }
}

</mosaic_0001>

<llo_original>
// kernel: tpu_custom_call.1
$region0: #{tpu_custom_call.1}
  #allocation0 [shape = 'u32[]', space=smem, size = 0x4, offset = 0x4, fixed_abs, tag = 'smem constant byte address 0x4 - core index']
  #allocation1 [shape = 'u32[72,128]{1,0:T(1,128)}', space=vmem, size = 0x9000, scoped, tag = 'internal scratch']
  %s0 = inlined_call_operand.hbm [shape: f32[2,1024], index: 0, kind: input, shape index: {}]
  %s1 = inlined_call_operand.hbm [shape: f32[2,1024], index: 1, kind: output, shape index: {}]
  %s2 = sld [smem:[#allocation0]]
  $region18: #{tpu_custom_call.1} parent=0
    _
  %s4 = ssub.s32 1, %s2
  %s5 = scalar_select 0, %s4, %s2
  $region1: #{tpu_custom_call.1} parent=0
    #allocation2 [shape = 'u8[8192]{0}', space=vmem, size = 0x2000, scoped, tag = 'input window, operand 0, single buffered']
    #allocation3 [shape = 's32[1]{0}', space=sflag, size = 0x4, scoped, tag = 'scoped memory for tpu_custom_call.1']
    #allocation4 [shape = 's32[1]{0}', space=sflag, size = 0x4, scoped, tag = 'scoped memory for tpu_custom_call.1']
    #allocation5 [shape = 'u8[8192]{0}', space=vmem, size = 0x2000, scoped, tag = 'output window, operand 0, single buffered']
    %6 = vsyncpa [#allocation3], 0
    %7 = vsyncpa [#allocation4], 0
    // Predicated region
    $region2: #{tpu_custom_call.1} parent=1 // pred_check
      _
    $region3: #{tpu_custom_call.1} parent=1 // pred_check_branch
      %9 = sbr.rel (0) target = $region5
    $region4: #{tpu_custom_call.1} parent=1 // pred_region
      %11 = vsyncadd [#allocation3], 0
      %s13 = sshll.u32 %s0, 4
      %s14 = int_to_ptr.hbm [resolvable:$true] %s13
      %s15 = sshll.u32 [#allocation2], 4
      %s16 = int_to_ptr.vmem [resolvable:$true] %s15
      %18 = dma.hbm_to_vmem [thread:$0]  %s14, 256, %s16, [#allocation3]
    $region5: #{tpu_custom_call.1} parent=1 // pred_fallthru
      _
    // Predicated region
    $region6: #{tpu_custom_call.1} parent=1 // pred_check
      _
    $region7: #{tpu_custom_call.1} parent=1 // pred_check_branch
      %20 = sbr.rel (0) target = $region9
    $region8: #{tpu_custom_call.1} parent=1 // pred_region
      %22 = dma.done [#allocation3], 256
    $region9: #{tpu_custom_call.1} parent=1 // pred_fallthru
      _
    %v23 = vld [vmem:[#allocation2] sm:$0xff]
    %v24 = vld [vmem:[#allocation2 + $0x8] sm:$0xff]
    %v25 = vtanh.pop %v23
    %v26 = vtanh.pop %v24
    %v27 = vand.u32 2147483647, %v25
    %v28 = vand.u32 2147483647, %v26
    %31 = vst [vmem:[#allocation1] ss:$4 sm:$0xff] %v27
    %s32 = scalar_lea.vmem [#allocation1], 32
    %33 = vst [vmem:[%s32] ss:$4 sm:$0xff] %v28
    %v34 = vld.sshfl [vmem:[#allocation1] sm:$0xff pattern:$0x73625140]
    %v35 = vld.sshfl [vmem:[#allocation1 + $0x8] sm:$0xff pattern:$0x73625140]
    %v36 = vld.sshfl [vmem:[#allocation1 + $0x10] sm:$0xff pattern:$0x73625140]
    %v37 = vld.sshfl [vmem:[#allocation1 + $0x18] sm:$0xff pattern:$0x73625140]
    %v38 = vld.sshfl [vmem:[#allocation1 + $0x20] sm:$0xff pattern:$0x73625140]
    %v39 = vld.sshfl [vmem:[#allocation1 + $0x28] sm:$0xff pattern:$0x73625140]
    %v40 = vld.sshfl [vmem:[#allocation1 + $0x30] sm:$0xff pattern:$0x73625140]
    %v41 = vld.sshfl [vmem:[#allocation1 + $0x38] sm:$0xff pattern:$0x73625140]
    %vm50 = vcmask 1041408
    %v51 = vsel %vm50, %v34, -inf
    %v52 = vsel %vm50, %v35, -inf
    %v53 = vsel %vm50, %v36, -inf
    %v54 = vsel %vm50, %v37, -inf
    %v55 = vsel %vm50, %v38, -inf
    %v56 = vmax.f32 %v51, %v55
    %v57 = vsel %vm50, %v39, -inf
    %v58 = vmax.f32 %v52, %v57
    %v59 = vsel %vm50, %v40, -inf
    %v60 = vmax.f32 %v53, %v59
    %v61 = vsel %vm50, %v41, -inf
    %v62 = vmax.f32 %v54, %v61
    %v63 = vmax.f32 %v56, %v58
    %v64 = vmax.f32 %v60, %v62
    %v65 = vmax.f32 %v63, %v64
    %66 = vmax.xlane.f32.xlu0 %v65
    %v67 = vpop.xlane.xlu0 %66
    %v68 = vrot.slane %v67, 4
    %v69 = vmax.f32 %v67, %v68
    %v70 = vrot.slane %v69, 2
    %v71 = vmax.f32 %v69, %v70
    %v72 = vrot.slane %v71, 1
    %v73 = vmax.f32 %v71, %v72
    %s74 = vtos %v73
    %v75 = vstv %s74
    %v76 = vrcp.pop %v75
    %v77 = vmul.f32 %v75, %v76
    %v78 = vsub.f32 1.0, %v77
    %v79 = vmul.f32 %v76, %v78
    %v80 = vadd.f32 %v76, %v79
    %vm81 = vweird.f32 %v75
    %vm82 = vweird.f32 %v76
    %vm83 = vmor %vm81, %vm82
    %v84 = vsel %vm83, %v76, %v80
    %v85 = vand.u32 2147483647, %v75
    %vm86 = vcmp.eq.f32.partialorder %v85, 8.507059e+37
    %v87 = vand.u32 %v75, 2147483648
    %v88 = vor.u32 1.1754944e-38, %v87
    %v89 = vsel %vm86, %v88, %v84
    %s90 = vtos %v89
    %s91 = smul.f32 0.5, %s90
    %v92 = vstv %s91
    %v93 = vmul.f32 %v25, %v92
    %v94 = vmul.f32 %v26, %v92
    %v95 = vadd.f32 %v93, 0.5
    %v96 = vadd.f32 %v94, 0.5
    %v97 = vmul.f32 %v95, 15.0
    %v98 = vmul.f32 %v96, 15.0
    %v99 = vround.ne.pseudo %v97
    %v100 = vround.ne.pseudo %v98
    %v101 = vmul.f32 %v99, 0.06666667
    %v102 = vmul.f32 %v100, 0.06666667
    %v103 = vmul.f32 %v101, 2.0
    %v104 = vmul.f32 %v102, 2.0
    %v105 = vsub.f32 %v103, 1.0
    %v106 = vsub.f32 %v104, 1.0
    %107 = vst [vmem:[#allocation5] sm:$0xff] %v105
    %108 = vst [vmem:[#allocation5 + $0x8] sm:$0xff] %v106
    // Predicated region
    $region10: #{tpu_custom_call.1} parent=1 // pred_check
      _
    $region11: #{tpu_custom_call.1} parent=1 // pred_check_branch
      %110 = sbr.rel (0) target = $region13
    $region12: #{tpu_custom_call.1} parent=1 // pred_region
      %112 = vsyncadd [#allocation4], 0
      %s114 = sshll.u32 [#allocation5], 4
      %s115 = int_to_ptr.vmem [resolvable:$true] %s114
      %s116 = sshll.u32 %s1, 4
      %s117 = int_to_ptr.hbm [resolvable:$true] %s116
      %119 = dma.vmem_to_hbm [thread:$0]  %s115, 256, %s117, [#allocation4]
    $region13: #{tpu_custom_call.1} parent=1 // pred_fallthru
      _
    // Predicated region
    $region14: #{tpu_custom_call.1} parent=1 // pred_check
      _
    $region15: #{tpu_custom_call.1} parent=1 // pred_check_branch
      %121 = sbr.rel (0) target = $region17
    $region16: #{tpu_custom_call.1} parent=1 // pred_region
      %123 = dma.done [#allocation4], 256
    $region17: #{tpu_custom_call.1} parent=1 // pred_fallthru
      _
    %124 = vsyncpa [#allocation3], 1
    %125 = vsyncpa [#allocation4], 1

</llo_original>
